<compile_context>
chip_gen: v7x
topology: tpu7x:2x2x1
jax: 0.10.0
libtpu: 0.0.40
codegen_flags: <defaults>
</compile_context>

<pallas_src>
import math

import jax
import jax.numpy as jnp
from jax.experimental import pallas as pl
from jax.experimental.pallas import tpu as pltpu

EPS = 1e-06
LOG_SIG_MAX = 1.38
LOG_SIG_MIN = -9.21

MAX_ACTION = 1.0
MIN_ACTION = -1.0

STATE_DIM = 32
ACTION_SIZE = 4
HIDDEN = 256
BATCH = 8

# Packed lane-dense layouts (both input and output are (B, 128) slabs).
PACK_W = 128
TILE_B_MAX = 256                  # 256-row tiles fill MXU rows on v5e/v6e/v7x

# Input slab lanes.
_EPS_OFF = STATE_DIM              # lanes [32, 36) : eps
# Output slab lanes.
_ACT_OFF = 0                      # lanes [0, 4)   : action
_LP_OFF = 8                       # lane  [8, 9)   : log_prob
_MEAN_OFF = 16                    # lanes [16, 20) : tanh-squashed mean
_LSTD_OFF = 20                    # lanes [20, 24) : clamped log_std

_HALF_LOG_2PI = 0.5 * math.log(2.0 * math.pi)
_ACTION_SCALE = (MAX_ACTION - MIN_ACTION) / 2.0
_ACTION_BIAS = (MAX_ACTION + MIN_ACTION) / 2.0


def _round_up(n, m):
    return ((n + m - 1) // m) * m


def _policy_kernel(xe_ref,
                   w1_ref, b1_ref, w2_ref, b2_ref,
                   w3_ref, b3_ref, w4_ref, b4_ref,
                   wh_ref, bh_ref,
                   out_ref):
    xe = xe_ref[...]                                  # (TB, 128) f32 input slab
    x = xe[:, 0:STATE_DIM]                            # state lanes
    eps = xe[:, _EPS_OFF:_EPS_OFF + ACTION_SIZE]      # noise lanes

    def dense_relu(h, w_ref, b_ref):
        y = jnp.dot(h.astype(jnp.bfloat16), w_ref[...],
                    preferred_element_type=jnp.float32) + b_ref[...]
        return jnp.maximum(y, 0.0)

    # 4-layer MLP trunk (bf16 MXU matmuls, f32 accumulate + f32 VPU relu).
    h = dense_relu(x, w1_ref, b1_ref)
    h = dense_relu(h, w2_ref, b2_ref)
    h = dense_relu(h, w3_ref, b3_ref)
    h = dense_relu(h, w4_ref, b4_ref)

    # Fused mean|log_std head: one (256, 128) zero-padded matmul.
    head = jnp.dot(h.astype(jnp.bfloat16), wh_ref[...],
                   preferred_element_type=jnp.float32) + bh_ref[...]
    mean = head[:, 0:ACTION_SIZE]
    log_std = jnp.clip(head[:, ACTION_SIZE:2 * ACTION_SIZE],
                       LOG_SIG_MIN, LOG_SIG_MAX)
    std = jnp.exp(log_std)

    # Reparameterized sample: x_t = mean + std * eps
    x_t = mean + std * eps
    y_t = jnp.tanh(x_t)
    action = y_t * _ACTION_SCALE + _ACTION_BIAS

    # Normal(mean, std).log_prob(x_t) = -eps^2/2 - log_std - 0.5*log(2*pi)
    # minus the tanh-squash correction log(scale * (1 - y_t^2) + EPS).
    log_prob = (-0.5 * eps * eps
                - log_std
                - _HALF_LOG_2PI
                - jnp.log(_ACTION_SCALE * (1.0 - y_t * y_t) + EPS))
    log_prob = jnp.sum(log_prob, axis=1, keepdims=True)          # (TB, 1)

    mean_t = jnp.tanh(mean) * _ACTION_SCALE + _ACTION_BIAS

    # Packed output: only the consumed lanes are written (no full-slab
    # zero-fill).  Lanes >= 24 are unspecified padding; the wrapper never
    # reads them.
    out_ref[:, _ACT_OFF:_ACT_OFF + ACTION_SIZE] = action
    out_ref[:, _LP_OFF:_LP_OFF + 1] = log_prob
    out_ref[:, _MEAN_OFF:_MEAN_OFF + ACTION_SIZE] = mean_t
    out_ref[:, _LSTD_OFF:_LSTD_OFF + ACTION_SIZE] = log_std


def pack_params(params):
    """Convert logical f32 Policy params -> kernel layout.

    Weights -> bf16 ([in, out]); mean/log_std heads fused and zero-padded to
    128 lanes.  Biases stay f32.
    """
    (w1, b1, w2, b2, w3, b3, w4, b4, wm, bm, ws, bs) = params

    wh = jnp.zeros((HIDDEN, PACK_W), jnp.float32)
    wh = wh.at[:, 0:ACTION_SIZE].set(wm)
    wh = wh.at[:, ACTION_SIZE:2 * ACTION_SIZE].set(ws)
    bh = jnp.zeros((1, PACK_W), jnp.float32)
    bh = bh.at[:, 0:ACTION_SIZE].set(bm)
    bh = bh.at[:, ACTION_SIZE:2 * ACTION_SIZE].set(bs)

    bf16 = lambda w: w.astype(jnp.bfloat16)
    f32 = lambda b: b.astype(jnp.float32)
    return (bf16(w1), f32(b1), bf16(w2), f32(b2),
            bf16(w3), f32(b3), bf16(w4), f32(b4),
            bf16(wh), f32(bh))


def dasco_policy_forward(state, eps, kernel_params):
    """Forward of DASCOAgent (== Policy.forward, stochastic). Returns (a, l, p, None)."""
    state = state.reshape(-1, STATE_DIM).astype(jnp.float32)
    eps = eps.reshape(-1, ACTION_SIZE).astype(jnp.float32)
    B = state.shape[0]

    # Adaptive batch tile: up to 256 rows per grid step (fills the MXU and
    # amortizes per-step overhead); small batches stay at grid=1 with no
    # wasted padded compute.
    tile_b = min(TILE_B_MAX, _round_up(max(B, 1), 8))
    Bp = _round_up(B, tile_b)

    # Fused lane-dense input slab: state lanes [0,32), eps lanes [32,36).
    slab = jnp.zeros((Bp, PACK_W), jnp.float32)
    slab = slab.at[:B, 0:STATE_DIM].set(state)
    slab = slab.at[:B, _EPS_OFF:_EPS_OFF + ACTION_SIZE].set(eps)

    (w1, b1, w2, b2, w3, b3, w4, b4, wh, bh) = kernel_params

    def w_spec(arr):
        # Grid-invariant: same block every step -> weights stay VMEM-resident.
        return pl.BlockSpec(arr.shape, lambda i: (0, 0))

    in_specs = [
        pl.BlockSpec((tile_b, PACK_W), lambda i: (i, 0)),   # fused state|eps slab
        w_spec(w1), w_spec(b1), w_spec(w2), w_spec(b2),
        w_spec(w3), w_spec(b3), w_spec(w4), w_spec(b4),
        w_spec(wh), w_spec(bh),
    ]
    out_spec = pl.BlockSpec((tile_b, PACK_W), lambda i: (i, 0))
    out_shape = jax.ShapeDtypeStruct((Bp, PACK_W), jnp.float32)

    packed = pl.pallas_call(
        _policy_kernel,
        out_shape=out_shape,
        grid=(Bp // tile_b,),
        in_specs=in_specs,
        out_specs=out_spec,
        # Only meaningful when grid > 1, i.e. 256 rows per step -- enough
        # per-core work to amortize the per-TC weight fetch on v7x megacore.
        compiler_params=pltpu.CompilerParams(
            dimension_semantics=("parallel",)),
    )(slab, w1, b1, w2, b2, w3, b3, w4, b4, wh, bh)

    packed = packed[:B]
    a = packed[:, _ACT_OFF:_ACT_OFF + ACTION_SIZE]
    l = packed[:, _LP_OFF:_LP_OFF + 1]
    p = packed[:, _MEAN_OFF:_LSTD_OFF + ACTION_SIZE]   # [mean_t | log_std]
    return a, l, p, None


def dasco_policy_ref(state, eps, kernel_params):
    """Pure-JAX reference mirroring the kernel's bf16-input / f32-accumulate math."""
    state = state.reshape(-1, STATE_DIM).astype(jnp.float32)
    eps = eps.reshape(-1, ACTION_SIZE).astype(jnp.float32)
    (w1, b1, w2, b2, w3, b3, w4, b4, wh, bh) = kernel_params

    def dense_relu(h, w, b):
        y = jnp.dot(h.astype(jnp.bfloat16), w,
                    preferred_element_type=jnp.float32) + b
        return jnp.maximum(y, 0.0)

    h = dense_relu(state, w1, b1)
    h = dense_relu(h, w2, b2)
    h = dense_relu(h, w3, b3)
    h = dense_relu(h, w4, b4)
    head = jnp.dot(h.astype(jnp.bfloat16), wh,
                   preferred_element_type=jnp.float32) + bh
    mean = head[:, 0:ACTION_SIZE]
    log_std = jnp.clip(head[:, ACTION_SIZE:2 * ACTION_SIZE],
                       LOG_SIG_MIN, LOG_SIG_MAX)
    std = jnp.exp(log_std)
    x_t = mean + std * eps
    y_t = jnp.tanh(x_t)
    action = y_t * _ACTION_SCALE + _ACTION_BIAS
    log_prob = (-0.5 * eps * eps - log_std - _HALF_LOG_2PI
                - jnp.log(_ACTION_SCALE * (1.0 - y_t * y_t) + EPS))
    log_prob = jnp.sum(log_prob, axis=1, keepdims=True)
    mean_t = jnp.tanh(mean) * _ACTION_SCALE + _ACTION_BIAS
    return action, log_prob, jnp.concatenate([mean_t, log_std], axis=1), None


def init_params(key):
    """Deterministic synthetic init of Policy parameters (W stored as [in, out], f32)."""
    ks = jax.random.split(key, 12)

    def lin(kw, kb, fan_in, fan_out):
        lim = 1.0 / jnp.sqrt(fan_in)
        w = jax.random.uniform(kw, (fan_in, fan_out), jnp.float32, -lim, lim)
        b = jax.random.uniform(kb, (1, fan_out), jnp.float32, -lim, lim)
        return w, b

    w1, b1 = lin(ks[0], ks[1], STATE_DIM, HIDDEN)
    w2, b2 = lin(ks[2], ks[3], HIDDEN, HIDDEN)
    w3, b3 = lin(ks[4], ks[5], HIDDEN, HIDDEN)
    w4, b4 = lin(ks[6], ks[7], HIDDEN, HIDDEN)
    wm, bm = lin(ks[8], ks[9], HIDDEN, ACTION_SIZE)
    ws, bs = lin(ks[10], ks[11], HIDDEN, ACTION_SIZE)
    return (w1, b1, w2, b2, w3, b3, w4, b4, wm, bm, ws, bs)


if __name__ == "__main__":
    key = jax.random.PRNGKey(0)
    k_param, k_s1, k_e1, k_s2, k_e2 = jax.random.split(key, 5)

    params = init_params(k_param)
    kernel_params = pack_params(params)

    def run_and_check(B, ks, ke):
        state = jax.random.normal(ks, (B, STATE_DIM), jnp.float32)
        eps = jax.random.normal(ke, (B, ACTION_SIZE), jnp.float32)

        a, l, p, _ = dasco_policy_forward(state, eps, kernel_params)
        ar, lr, pr, _ = dasco_policy_ref(state, eps, kernel_params)
        jax.block_until_ready((a, l, p, ar, lr, pr))

        assert a.shape == (B, ACTION_SIZE)
        assert l.shape == (B, 1)
        assert p.shape == (B, 2 * ACTION_SIZE)
        assert bool(jnp.all(jnp.isfinite(a)))
        assert bool(jnp.all(jnp.isfinite(l)))
        assert bool(jnp.all(jnp.isfinite(p)))
        # Action must lie inside the tanh-squashed range.
        assert bool(jnp.all(a <= MAX_ACTION)) and bool(jnp.all(a >= MIN_ACTION))
        # Match the pure-JAX reference (same bf16-matmul / f32-accumulate math).
        assert bool(jnp.allclose(a, ar, atol=2e-2, rtol=2e-2))
        assert bool(jnp.allclose(l, lr, atol=2e-2, rtol=2e-2))
        assert bool(jnp.allclose(p, pr, atol=2e-2, rtol=2e-2))

    # Small batch: tile_b = 8, grid = 1 (single step, no wasted padding).
    run_and_check(BATCH, k_s1, k_e1)
    # Larger, non-multiple batch: tile_b = 256, padded to 512, grid = 2
    # (exercises batch padding, multi-step grid and the megacore path).
    run_and_check(300, k_s2, k_e2)

    # TODO(synk): training-time methods (update/compute_target/buffers/optimizers,
    # Critic/Discriminator/Generator nets) are host-side RL training logic, not
    # part of DASCOAgent.forward(), and are not kernelized.
    print("KERNEL_OK")
</pallas_src>

<mosaic_0001>
module attributes {stable_mosaic.version = 11 : i64} {
  func.func @_policy_kernel(%arg0: i32, %arg1: memref<8x128xf32, #tpu.memory_space<vmem>>, %arg2: memref<32x256xbf16, #tpu.memory_space<vmem>>, %arg3: memref<1x256xf32, #tpu.memory_space<vmem>>, %arg4: memref<256x256xbf16, #tpu.memory_space<vmem>>, %arg5: memref<1x256xf32, #tpu.memory_space<vmem>>, %arg6: memref<256x256xbf16, #tpu.memory_space<vmem>>, %arg7: memref<1x256xf32, #tpu.memory_space<vmem>>, %arg8: memref<256x256xbf16, #tpu.memory_space<vmem>>, %arg9: memref<1x256xf32, #tpu.memory_space<vmem>>, %arg10: memref<256x128xbf16, #tpu.memory_space<vmem>>, %arg11: memref<1x128xf32, #tpu.memory_space<vmem>>, %arg12: memref<8x128xf32, #tpu.memory_space<vmem>>) attributes {dimension_semantics = [#tpu.dimension_semantics<parallel>], iteration_bounds = array<i64: 1>, scalar_prefetch = 0 : i64, scratch_operands = 0 : i64, tpu.core_type = #tpu.core_type<tc>, window_params = [{transform_indices = @transform_0, window_bounds = array<i64: 8, 128>}, {pipeline_mode = #tpu.pipeline_mode<synchronous>, transform_indices = @transform_1, window_bounds = array<i64: 32, 256>}, {pipeline_mode = #tpu.pipeline_mode<synchronous>, transform_indices = @transform_2, window_bounds = array<i64: 1, 256>}, {pipeline_mode = #tpu.pipeline_mode<synchronous>, transform_indices = @transform_3, window_bounds = array<i64: 256, 256>}, {pipeline_mode = #tpu.pipeline_mode<synchronous>, transform_indices = @transform_4, window_bounds = array<i64: 1, 256>}, {pipeline_mode = #tpu.pipeline_mode<synchronous>, transform_indices = @transform_5, window_bounds = array<i64: 256, 256>}, {pipeline_mode = #tpu.pipeline_mode<synchronous>, transform_indices = @transform_6, window_bounds = array<i64: 1, 256>}, {pipeline_mode = #tpu.pipeline_mode<synchronous>, transform_indices = @transform_7, window_bounds = array<i64: 256, 256>}, {pipeline_mode = #tpu.pipeline_mode<synchronous>, transform_indices = @transform_8, window_bounds = array<i64: 1, 256>}, {pipeline_mode = #tpu.pipeline_mode<synchronous>, transform_indices = @transform_9, window_bounds = array<i64: 256, 128>}, {pipeline_mode = #tpu.pipeline_mode<synchronous>, transform_indices = @transform_10, window_bounds = array<i64: 1, 128>}, {transform_indices = @transform_11, window_bounds = array<i64: 8, 128>}]} {
    %c0 = arith.constant 0 : index
    %c0_0 = arith.constant 0 : index
    %0 = vector.load %arg1[%c0, %c0_0] : memref<8x128xf32, #tpu.memory_space<vmem>>, vector<8x128xf32>
    %1 = vector.extract_strided_slice %0 {offsets = [0, 0], sizes = [8, 32], strides = [1, 1]} : vector<8x128xf32> to vector<8x32xf32>
    %2 = vector.extract_strided_slice %0 {offsets = [0, 32], sizes = [8, 4], strides = [1, 1]} : vector<8x128xf32> to vector<8x4xf32>
    %3 = arith.truncf %1 : vector<8x32xf32> to vector<8x32xbf16>
    %c0_1 = arith.constant 0 : index
    %c0_2 = arith.constant 0 : index
    %4 = vector.load %arg2[%c0_1, %c0_2] : memref<32x256xbf16, #tpu.memory_space<vmem>>, vector<32x256xbf16>
    %cst = arith.constant dense<0.000000e+00> : vector<8x256xf32>
    %5 = tpu.matmul %3, %4, %cst {dimension_numbers = #tpu.dot_dimension_numbers<[1], [0], [0], [1], [0, 0, 1, 1], [], []>} : vector<8x32xbf16>, vector<32x256xbf16>, vector<8x256xf32> -> vector<8x256xf32>
    %c0_3 = arith.constant 0 : index
    %c0_4 = arith.constant 0 : index
    %6 = vector.load %arg3[%c0_3, %c0_4] : memref<1x256xf32, #tpu.memory_space<vmem>>, vector<1x256xf32>
    %7 = vector.broadcast %6 : vector<1x256xf32> to vector<8x256xf32>
    %8 = arith.addf %5, %7 : vector<8x256xf32>
    %cst_5 = arith.constant 0.000000e+00 : f32
    %9 = vector.broadcast %cst_5 : f32 to vector<8x256xf32>
    %10 = arith.maximumf %8, %9 : vector<8x256xf32>
    %11 = arith.truncf %10 : vector<8x256xf32> to vector<8x256xbf16>
    %c0_6 = arith.constant 0 : index
    %c0_7 = arith.constant 0 : index
    %12 = vector.load %arg4[%c0_6, %c0_7] : memref<256x256xbf16, #tpu.memory_space<vmem>>, vector<256x256xbf16>
    %cst_8 = arith.constant dense<0.000000e+00> : vector<8x256xf32>
    %13 = tpu.matmul %11, %12, %cst_8 {dimension_numbers = #tpu.dot_dimension_numbers<[1], [0], [0], [1], [0, 0, 1, 1], [], []>} : vector<8x256xbf16>, vector<256x256xbf16>, vector<8x256xf32> -> vector<8x256xf32>
    %c0_9 = arith.constant 0 : index
    %c0_10 = arith.constant 0 : index
    %14 = vector.load %arg5[%c0_9, %c0_10] : memref<1x256xf32, #tpu.memory_space<vmem>>, vector<1x256xf32>
    %15 = vector.broadcast %14 : vector<1x256xf32> to vector<8x256xf32>
    %16 = arith.addf %13, %15 : vector<8x256xf32>
    %cst_11 = arith.constant 0.000000e+00 : f32
    %17 = vector.broadcast %cst_11 : f32 to vector<8x256xf32>
    %18 = arith.maximumf %16, %17 : vector<8x256xf32>
    %19 = arith.truncf %18 : vector<8x256xf32> to vector<8x256xbf16>
    %c0_12 = arith.constant 0 : index
    %c0_13 = arith.constant 0 : index
    %20 = vector.load %arg6[%c0_12, %c0_13] : memref<256x256xbf16, #tpu.memory_space<vmem>>, vector<256x256xbf16>
    %cst_14 = arith.constant dense<0.000000e+00> : vector<8x256xf32>
    %21 = tpu.matmul %19, %20, %cst_14 {dimension_numbers = #tpu.dot_dimension_numbers<[1], [0], [0], [1], [0, 0, 1, 1], [], []>} : vector<8x256xbf16>, vector<256x256xbf16>, vector<8x256xf32> -> vector<8x256xf32>
    %c0_15 = arith.constant 0 : index
    %c0_16 = arith.constant 0 : index
    %22 = vector.load %arg7[%c0_15, %c0_16] : memref<1x256xf32, #tpu.memory_space<vmem>>, vector<1x256xf32>
    %23 = vector.broadcast %22 : vector<1x256xf32> to vector<8x256xf32>
    %24 = arith.addf %21, %23 : vector<8x256xf32>
    %cst_17 = arith.constant 0.000000e+00 : f32
    %25 = vector.broadcast %cst_17 : f32 to vector<8x256xf32>
    %26 = arith.maximumf %24, %25 : vector<8x256xf32>
    %27 = arith.truncf %26 : vector<8x256xf32> to vector<8x256xbf16>
    %c0_18 = arith.constant 0 : index
    %c0_19 = arith.constant 0 : index
    %28 = vector.load %arg8[%c0_18, %c0_19] : memref<256x256xbf16, #tpu.memory_space<vmem>>, vector<256x256xbf16>
    %cst_20 = arith.constant dense<0.000000e+00> : vector<8x256xf32>
    %29 = tpu.matmul %27, %28, %cst_20 {dimension_numbers = #tpu.dot_dimension_numbers<[1], [0], [0], [1], [0, 0, 1, 1], [], []>} : vector<8x256xbf16>, vector<256x256xbf16>, vector<8x256xf32> -> vector<8x256xf32>
    %c0_21 = arith.constant 0 : index
    %c0_22 = arith.constant 0 : index
    %30 = vector.load %arg9[%c0_21, %c0_22] : memref<1x256xf32, #tpu.memory_space<vmem>>, vector<1x256xf32>
    %31 = vector.broadcast %30 : vector<1x256xf32> to vector<8x256xf32>
    %32 = arith.addf %29, %31 : vector<8x256xf32>
    %cst_23 = arith.constant 0.000000e+00 : f32
    %33 = vector.broadcast %cst_23 : f32 to vector<8x256xf32>
    %34 = arith.maximumf %32, %33 : vector<8x256xf32>
    %35 = arith.truncf %34 : vector<8x256xf32> to vector<8x256xbf16>
    %c0_24 = arith.constant 0 : index
    %c0_25 = arith.constant 0 : index
    %36 = vector.load %arg10[%c0_24, %c0_25] : memref<256x128xbf16, #tpu.memory_space<vmem>>, vector<256x128xbf16>
    %cst_26 = arith.constant dense<0.000000e+00> : vector<8x128xf32>
    %37 = tpu.matmul %35, %36, %cst_26 {dimension_numbers = #tpu.dot_dimension_numbers<[1], [0], [0], [1], [0, 0, 1, 1], [], []>} : vector<8x256xbf16>, vector<256x128xbf16>, vector<8x128xf32> -> vector<8x128xf32>
    %c0_27 = arith.constant 0 : index
    %c0_28 = arith.constant 0 : index
    %38 = vector.load %arg11[%c0_27, %c0_28] : memref<1x128xf32, #tpu.memory_space<vmem>>, vector<1x128xf32>
    %39 = vector.broadcast %38 : vector<1x128xf32> to vector<8x128xf32>
    %40 = arith.addf %37, %39 : vector<8x128xf32>
    %41 = vector.extract_strided_slice %40 {offsets = [0, 0], sizes = [8, 4], strides = [1, 1]} : vector<8x128xf32> to vector<8x4xf32>
    %42 = vector.extract_strided_slice %40 {offsets = [0, 4], sizes = [8, 4], strides = [1, 1]} : vector<8x128xf32> to vector<8x4xf32>
    %cst_29 = arith.constant -9.210000e+00 : f32
    %cst_30 = arith.constant 1.380000e+00 : f32
    %43 = vector.broadcast %cst_29 : f32 to vector<8x4xf32>
    %44 = arith.maximumf %43, %42 : vector<8x4xf32>
    %45 = vector.broadcast %cst_30 : f32 to vector<8x4xf32>
    %46 = arith.minimumf %45, %44 : vector<8x4xf32>
    %47 = math.exp %46 : vector<8x4xf32>
    %48 = arith.mulf %47, %2 : vector<8x4xf32>
    %49 = arith.addf %41, %48 : vector<8x4xf32>
    %50 = math.tanh %49 : vector<8x4xf32>
    %cst_31 = arith.constant 1.000000e+00 : f32
    %51 = vector.broadcast %cst_31 : f32 to vector<8x4xf32>
    %52 = arith.mulf %50, %51 : vector<8x4xf32>
    %cst_32 = arith.constant 0.000000e+00 : f32
    %53 = vector.broadcast %cst_32 : f32 to vector<8x4xf32>
    %54 = arith.addf %52, %53 : vector<8x4xf32>
    %cst_33 = arith.constant -5.000000e-01 : f32
    %55 = vector.broadcast %cst_33 : f32 to vector<8x4xf32>
    %56 = arith.mulf %55, %2 : vector<8x4xf32>
    %57 = arith.mulf %56, %2 : vector<8x4xf32>
    %58 = arith.subf %57, %46 : vector<8x4xf32>
    %cst_34 = arith.constant 0.918938517 : f32
    %59 = vector.broadcast %cst_34 : f32 to vector<8x4xf32>
    %60 = arith.subf %58, %59 : vector<8x4xf32>
    %61 = arith.mulf %50, %50 : vector<8x4xf32>
    %cst_35 = arith.constant 1.000000e+00 : f32
    %62 = vector.broadcast %cst_35 : f32 to vector<8x4xf32>
    %63 = arith.subf %62, %61 : vector<8x4xf32>
    %cst_36 = arith.constant 1.000000e+00 : f32
    %64 = vector.broadcast %cst_36 : f32 to vector<8x4xf32>
    %65 = arith.mulf %64, %63 : vector<8x4xf32>
    %cst_37 = arith.constant 9.99999997E-7 : f32
    %66 = vector.broadcast %cst_37 : f32 to vector<8x4xf32>
    %67 = arith.addf %65, %66 : vector<8x4xf32>
    %68 = math.log %67 : vector<8x4xf32>
    %69 = arith.subf %60, %68 : vector<8x4xf32>
    %cst_38 = arith.constant dense<0.000000e+00> : vector<8xf32>
    %70 = vector.multi_reduction <add>, %69, %cst_38 [1] : vector<8x4xf32> to vector<8xf32>
    %71 = vector.shape_cast %70 : vector<8xf32> to vector<8x1xf32>
    %72 = math.tanh %41 : vector<8x4xf32>
    %cst_39 = arith.constant 1.000000e+00 : f32
    %73 = vector.broadcast %cst_39 : f32 to vector<8x4xf32>
    %74 = arith.mulf %72, %73 : vector<8x4xf32>
    %cst_40 = arith.constant 0.000000e+00 : f32
    %75 = vector.broadcast %cst_40 : f32 to vector<8x4xf32>
    %76 = arith.addf %74, %75 : vector<8x4xf32>
    %c0_41 = arith.constant 0 : index
    %c0_42 = arith.constant 0 : index
    %77 = vector.load %arg12[%c0_41, %c0_42] : memref<8x128xf32, #tpu.memory_space<vmem>>, vector<8x4xf32>
    tpu.vector_store %arg12[%c0_41, %c0_42], %54 {strides = array<i32>} : memref<8x128xf32, #tpu.memory_space<vmem>>, vector<8x4xf32>,
    %c0_43 = arith.constant 0 : index
    %c8 = arith.constant 8 : index
    %78 = vector.load %arg12[%c0_43, %c8] : memref<8x128xf32, #tpu.memory_space<vmem>>, vector<8x1xf32>
    tpu.vector_store %arg12[%c0_43, %c8], %71 {strides = array<i32>} : memref<8x128xf32, #tpu.memory_space<vmem>>, vector<8x1xf32>,
    %c0_44 = arith.constant 0 : index
    %c16 = arith.constant 16 : index
    %79 = vector.load %arg12[%c0_44, %c16] : memref<8x128xf32, #tpu.memory_space<vmem>>, vector<8x4xf32>
    tpu.vector_store %arg12[%c0_44, %c16], %76 {strides = array<i32>} : memref<8x128xf32, #tpu.memory_space<vmem>>, vector<8x4xf32>,
    %c0_45 = arith.constant 0 : index
    %c20 = arith.constant 20 : index
    %80 = vector.load %arg12[%c0_45, %c20] : memref<8x128xf32, #tpu.memory_space<vmem>>, vector<8x4xf32>
    tpu.vector_store %arg12[%c0_45, %c20], %46 {strides = array<i32>} : memref<8x128xf32, #tpu.memory_space<vmem>>, vector<8x4xf32>,
    return
  }
  func.func @transform_0(%arg0: i32) -> (i32, i32) {
    %c0_i32 = arith.constant 0 : i32
    %c0_i32_0 = arith.constant 0 : i32
    return %arg0, %c0_i32 : i32, i32
  }
  func.func @transform_1(%arg0: i32) -> (i32, i32) {
    %c0_i32 = arith.constant 0 : i32
    %c0_i32_0 = arith.constant 0 : i32
    %c0_i32_1 = arith.constant 0 : i32
    return %c0_i32, %c0_i32_0 : i32, i32
  }
  func.func @transform_2(%arg0: i32) -> (i32, i32) {
    %c0_i32 = arith.constant 0 : i32
    %c0_i32_0 = arith.constant 0 : i32
    %c0_i32_1 = arith.constant 0 : i32
    return %c0_i32, %c0_i32_0 : i32, i32
  }
  func.func @transform_3(%arg0: i32) -> (i32, i32) {
    %c0_i32 = arith.constant 0 : i32
    %c0_i32_0 = arith.constant 0 : i32
    %c0_i32_1 = arith.constant 0 : i32
    return %c0_i32, %c0_i32_0 : i32, i32
  }
  func.func @transform_4(%arg0: i32) -> (i32, i32) {
    %c0_i32 = arith.constant 0 : i32
    %c0_i32_0 = arith.constant 0 : i32
    %c0_i32_1 = arith.constant 0 : i32
    return %c0_i32, %c0_i32_0 : i32, i32
  }
  func.func @transform_5(%arg0: i32) -> (i32, i32) {
    %c0_i32 = arith.constant 0 : i32
    %c0_i32_0 = arith.constant 0 : i32
    %c0_i32_1 = arith.constant 0 : i32
    return %c0_i32, %c0_i32_0 : i32, i32
  }
  func.func @transform_6(%arg0: i32) -> (i32, i32) {
    %c0_i32 = arith.constant 0 : i32
    %c0_i32_0 = arith.constant 0 : i32
    %c0_i32_1 = arith.constant 0 : i32
    return %c0_i32, %c0_i32_0 : i32, i32
  }
  func.func @transform_7(%arg0: i32) -> (i32, i32) {
    %c0_i32 = arith.constant 0 : i32
    %c0_i32_0 = arith.constant 0 : i32
    %c0_i32_1 = arith.constant 0 : i32
    return %c0_i32, %c0_i32_0 : i32, i32
  }
  func.func @transform_8(%arg0: i32) -> (i32, i32) {
    %c0_i32 = arith.constant 0 : i32
    %c0_i32_0 = arith.constant 0 : i32
    %c0_i32_1 = arith.constant 0 : i32
    return %c0_i32, %c0_i32_0 : i32, i32
  }
  func.func @transform_9(%arg0: i32) -> (i32, i32) {
    %c0_i32 = arith.constant 0 : i32
    %c0_i32_0 = arith.constant 0 : i32
    %c0_i32_1 = arith.constant 0 : i32
    return %c0_i32, %c0_i32_0 : i32, i32
  }
  func.func @transform_10(%arg0: i32) -> (i32, i32) {
    %c0_i32 = arith.constant 0 : i32
    %c0_i32_0 = arith.constant 0 : i32
    %c0_i32_1 = arith.constant 0 : i32
    return %c0_i32, %c0_i32_0 : i32, i32
  }
  func.func @transform_11(%arg0: i32) -> (i32, i32) {
    %c0_i32 = arith.constant 0 : i32
    %c0_i32_0 = arith.constant 0 : i32
    return %arg0, %c0_i32 : i32, i32
  }
}

</mosaic_0001>

<llo_original>
// kernel: tpu_custom_call.1
$region0: #{tpu_custom_call.1}
  #allocation0 [shape = 'u32[]', space=smem, size = 0x4, offset = 0x4, fixed_abs, tag = 'smem constant byte address 0x4 - core index']
  #allocation1 [shape = 'u32[144,128]{1,0:T(1,128)}', space=vmem, size = 0x12000, scoped, tag = 'internal scratch']
  %s0 = inlined_call_operand.hbm [shape: f32[8,128], index: 0, kind: input, shape index: {}]
  %s1 = inlined_call_operand.hbm [shape: bf16[32,256], index: 1, kind: input, shape index: {}]
  %s2 = inlined_call_operand.vmem [shape: f32[1,256], index: 2, kind: input, shape index: {}]
  %s3 = inlined_call_operand.hbm [shape: bf16[256,256], index: 3, kind: input, shape index: {}]
  %s4 = inlined_call_operand.vmem [shape: f32[1,256], index: 4, kind: input, shape index: {}]
  %s5 = inlined_call_operand.hbm [shape: bf16[256,256], index: 5, kind: input, shape index: {}]
  %s6 = inlined_call_operand.vmem [shape: f32[1,256], index: 6, kind: input, shape index: {}]
  %s7 = inlined_call_operand.hbm [shape: bf16[256,256], index: 7, kind: input, shape index: {}]
  %s8 = inlined_call_operand.vmem [shape: f32[1,256], index: 8, kind: input, shape index: {}]
  %s9 = inlined_call_operand.hbm [shape: bf16[256,128], index: 9, kind: input, shape index: {}]
  %s10 = inlined_call_operand.vmem [shape: f32[1,128], index: 10, kind: input, shape index: {}]
  %s11 = inlined_call_operand.hbm [shape: f32[8,128], index: 11, kind: output, shape index: {}]
  %s12 = sld [smem:[#allocation0]]
  $region78: #{tpu_custom_call.1} parent=0
    _
  %s14 = ssub.s32 1, %s12
  %s15 = scalar_select 0, %s14, %s12
  $region1: #{tpu_custom_call.1} parent=0
    #allocation2 [shape = 'u8[4096]{0}', space=vmem, size = 0x1000, scoped, tag = 'input window, operand 0, single buffered']
    #allocation3 [shape = 's32[1]{0}', space=sflag, size = 0x4, scoped, tag = 'scoped memory for tpu_custom_call.1']
    #allocation4 [shape = 's32[1]{0}', space=sflag, size = 0x4, scoped, tag = 'scoped memory for tpu_custom_call.1']
    #allocation5 [shape = 'u8[16384]{0}', space=vmem, size = 0x4000, scoped, tag = 'input window, operand 1, single buffered']
    #allocation6 [shape = 's32[1]{0}', space=sflag, size = 0x4, scoped, tag = 'scoped memory for tpu_custom_call.1']
    #allocation7 [shape = 'u8[131072]{0}', space=vmem, size = 0x20000, scoped, tag = 'input window, operand 3, single buffered']
    #allocation8 [shape = 'u8[131072]{0}', space=vmem, size = 0x20000, scoped, tag = 'input window, operand 5, single buffered']
    #allocation9 [shape = 's32[1]{0}', space=sflag, size = 0x4, scoped, tag = 'scoped memory for tpu_custom_call.1']
    #allocation10 [shape = 'u8[131072]{0}', space=vmem, size = 0x20000, scoped, tag = 'input window, operand 7, single buffered']
    #allocation11 [shape = 'u8[65536]{0}', space=vmem, size = 0x10000, scoped, tag = 'input window, operand 9, single buffered']
    #allocation12 [shape = 's32[1]{0}', space=sflag, size = 0x4, scoped, tag = 'scoped memory for tpu_custom_call.1']
    #allocation13 [shape = 'u8[4096]{0}', space=vmem, size = 0x1000, scoped, tag = 'output window, operand 0, single buffered']
    %16 = vsyncpa [#allocation3], 0
    %17 = vsyncpa [#allocation6], 0
    %18 = vsyncpa [#allocation9], 0
    %19 = vsyncpa [#allocation12], 0
    %20 = vsyncpa [#allocation4], 0
    // Predicated region
    $region2: #{tpu_custom_call.1} parent=1 // pred_check
      _
    $region3: #{tpu_custom_call.1} parent=1 // pred_check_branch
      %22 = sbr.rel (0) target = $region5
    $region4: #{tpu_custom_call.1} parent=1 // pred_region
      %s24 = ssub.s32 128, 128
      %25 = vsyncadd [#allocation3], %s24
      %s27 = sshll.u32 [#allocation2], 4
      %s28 = int_to_ptr.vmem [resolvable:$true] %s27
      %30 = dma.hbm_to_vmem [thread:$0]  %s0, 128, %s28, [#allocation3]
    $region5: #{tpu_custom_call.1} parent=1 // pred_fallthru
      _
    // Predicated region
    $region6: #{tpu_custom_call.1} parent=1 // pred_check
      _
    $region7: #{tpu_custom_call.1} parent=1 // pred_check_branch
      %32 = sbr.rel (0) target = $region9
    $region8: #{tpu_custom_call.1} parent=1 // pred_region
      %s34 = ssub.s32 512, 512
      %35 = vsyncadd [#allocation6], %s34
      %s36 = sshll.u32 [#allocation5], 4
      %s37 = int_to_ptr.vmem [resolvable:$true] %s36
      %42 = dma.hbm_to_vmem [thread:$0]  %s1, 512, %s37, [#allocation6], 128, 128, 8
    $region9: #{tpu_custom_call.1} parent=1 // pred_fallthru
      _
    // Predicated region
    $region10: #{tpu_custom_call.1} parent=1 // pred_check
      _
    $region11: #{tpu_custom_call.1} parent=1 // pred_check_branch
      %44 = sbr.rel (0) target = $region13
    $region12: #{tpu_custom_call.1} parent=1 // pred_region
      _
    $region13: #{tpu_custom_call.1} parent=1 // pred_fallthru
      _
    // Predicated region
    $region14: #{tpu_custom_call.1} parent=1 // pred_check
      _
    $region15: #{tpu_custom_call.1} parent=1 // pred_check_branch
      %46 = sbr.rel (0) target = $region17
    $region16: #{tpu_custom_call.1} parent=1 // pred_region
      %s48 = ssub.s32 4096, 4096
      %49 = vsyncadd [#allocation6], %s48
      %s50 = sshll.u32 [#allocation7], 4
      %s51 = int_to_ptr.vmem [resolvable:$true] %s50
      %56 = dma.hbm_to_vmem [thread:$0]  %s3, 4096, %s51, [#allocation6], 128, 128, 8
    $region17: #{tpu_custom_call.1} parent=1 // pred_fallthru
      _
    // Predicated region
    $region18: #{tpu_custom_call.1} parent=1 // pred_check
      _
    $region19: #{tpu_custom_call.1} parent=1 // pred_check_branch
      %58 = sbr.rel (0) target = $region21
    $region20: #{tpu_custom_call.1} parent=1 // pred_region
      _
    $region21: #{tpu_custom_call.1} parent=1 // pred_fallthru
      _
    // Predicated region
    $region22: #{tpu_custom_call.1} parent=1 // pred_check
      _
    $region23: #{tpu_custom_call.1} parent=1 // pred_check_branch
      %60 = sbr.rel (0) target = $region25
    $region24: #{tpu_custom_call.1} parent=1 // pred_region
      %s62 = ssub.s32 4096, 4096
      %63 = vsyncadd [#allocation9], %s62
      %s64 = sshll.u32 [#allocation8], 4
      %s65 = int_to_ptr.vmem [resolvable:$true] %s64
      %70 = dma.hbm_to_vmem [thread:$0]  %s5, 4096, %s65, [#allocation9], 128, 128, 8
    $region25: #{tpu_custom_call.1} parent=1 // pred_fallthru
      _
    // Predicated region
    $region26: #{tpu_custom_call.1} parent=1 // pred_check
      _
    $region27: #{tpu_custom_call.1} parent=1 // pred_check_branch
      %72 = sbr.rel (0) target = $region29
    $region28: #{tpu_custom_call.1} parent=1 // pred_region
      _
    $region29: #{tpu_custom_call.1} parent=1 // pred_fallthru
      _
    // Predicated region
    $region30: #{tpu_custom_call.1} parent=1 // pred_check
      _
    $region31: #{tpu_custom_call.1} parent=1 // pred_check_branch
      %74 = sbr.rel (0) target = $region33
    $region32: #{tpu_custom_call.1} parent=1 // pred_region
      %s76 = ssub.s32 4096, 4096
      %77 = vsyncadd [#allocation9], %s76
      %s78 = sshll.u32 [#allocation10], 4
      %s79 = int_to_ptr.vmem [resolvable:$true] %s78
      %84 = dma.hbm_to_vmem [thread:$0]  %s7, 4096, %s79, [#allocation9], 128, 128, 8
    $region33: #{tpu_custom_call.1} parent=1 // pred_fallthru
      _
    // Predicated region
    $region34: #{tpu_custom_call.1} parent=1 // pred_check
      _
    $region35: #{tpu_custom_call.1} parent=1 // pred_check_branch
      %86 = sbr.rel (0) target = $region37
    $region36: #{tpu_custom_call.1} parent=1 // pred_region
      _
    $region37: #{tpu_custom_call.1} parent=1 // pred_fallthru
      _
    // Predicated region
    $region38: #{tpu_custom_call.1} parent=1 // pred_check
      _
    $region39: #{tpu_custom_call.1} parent=1 // pred_check_branch
      %88 = sbr.rel (0) target = $region41
    $region40: #{tpu_custom_call.1} parent=1 // pred_region
      %s90 = ssub.s32 2048, 2048
      %91 = vsyncadd [#allocation12], %s90
      %s92 = sshll.u32 [#allocation11], 4
      %s93 = int_to_ptr.vmem [resolvable:$true] %s92
      %98 = dma.hbm_to_vmem [thread:$0]  %s9, 2048, %s93, [#allocation12], 64, 64, 4
    $region41: #{tpu_custom_call.1} parent=1 // pred_fallthru
      _
    // Predicated region
    $region42: #{tpu_custom_call.1} parent=1 // pred_check
      _
    $region43: #{tpu_custom_call.1} parent=1 // pred_check_branch
      %100 = sbr.rel (0) target = $region45
    $region44: #{tpu_custom_call.1} parent=1 // pred_region
      _
    $region45: #{tpu_custom_call.1} parent=1 // pred_fallthru
      _
    // Predicated region
    $region46: #{tpu_custom_call.1} parent=1 // pred_check
      _
    $region47: #{tpu_custom_call.1} parent=1 // pred_check_branch
      %102 = sbr.rel (0) target = $region49
    $region48: #{tpu_custom_call.1} parent=1 // pred_region
      %103 = dma.done [#allocation3], 128
    $region49: #{tpu_custom_call.1} parent=1 // pred_fallthru
      _
    // Predicated region
    $region50: #{tpu_custom_call.1} parent=1 // pred_check
      _
    $region51: #{tpu_custom_call.1} parent=1 // pred_check_branch
      %105 = sbr.rel (0) target = $region53
    $region52: #{tpu_custom_call.1} parent=1 // pred_region
      %106 = dma.done [#allocation6], 512
    $region53: #{tpu_custom_call.1} parent=1 // pred_fallthru
      _
    // Predicated region
    $region54: #{tpu_custom_call.1} parent=1 // pred_check
      _
    $region55: #{tpu_custom_call.1} parent=1 // pred_check_branch
      %108 = sbr.rel (0) target = $region57
    $region56: #{tpu_custom_call.1} parent=1 // pred_region
      %109 = dma.done [#allocation6], 4096
    $region57: #{tpu_custom_call.1} parent=1 // pred_fallthru
      _
    // Predicated region
    $region58: #{tpu_custom_call.1} parent=1 // pred_check
      _
    $region59: #{tpu_custom_call.1} parent=1 // pred_check_branch
      %111 = sbr.rel (0) target = $region61
    $region60: #{tpu_custom_call.1} parent=1 // pred_region
      %112 = dma.done [#allocation9], 4096
    $region61: #{tpu_custom_call.1} parent=1 // pred_fallthru
      _
    // Predicated region
    $region62: #{tpu_custom_call.1} parent=1 // pred_check
      _
    $region63: #{tpu_custom_call.1} parent=1 // pred_check_branch
      %114 = sbr.rel (0) target = $region65
    $region64: #{tpu_custom_call.1} parent=1 // pred_region
      %115 = dma.done [#allocation9], 4096
    $region65: #{tpu_custom_call.1} parent=1 // pred_fallthru
      _
    // Predicated region
    $region66: #{tpu_custom_call.1} parent=1 // pred_check
      _
    $region67: #{tpu_custom_call.1} parent=1 // pred_check_branch
      %117 = sbr.rel (0) target = $region69
    $region68: #{tpu_custom_call.1} parent=1 // pred_region
      %118 = dma.done [#allocation12], 2048
    $region69: #{tpu_custom_call.1} parent=1 // pred_fallthru
      _
    %v120 = vld [vmem:[#allocation2] sm:$0xff]
    %v121 = vpack.c.bf16 %v120, %v120
    %v122 = vld [vmem:[#allocation5] sm:$0xff]
    %v123 = vld [vmem:[#allocation5 + $0x8] sm:$0xff]
    %v124 = vld [vmem:[#allocation5 + $0x10] sm:$0xff]
    %v125 = vld [vmem:[#allocation5 + $0x18] sm:$0xff]
    %v126 = vld [vmem:[%s2] sm:$0x3]
    %v128 = vlaneseq
    %v129 = vshrl.u32 %v128, 7
    %v130 = vsub.s32 0, %v129
    %v131 = vrot.slane %v126, %v130
    %v132 = vlaneseq
    %v133 = vshrl.u32 %v132, 7
    %v134 = vsub.s32 1, %v133
    %v135 = vrot.slane %v126, %v134
    %v142 = vunpack.c.l.b16 %v122
    %v143 = vunpack.c.h.b16 %v122
    %v144 = vunpack.c.l.b16 %v123
    %v145 = vunpack.c.h.b16 %v123
    %v146 = vunpack.c.l.b16 %v124
    %v147 = vunpack.c.h.b16 %v124
    %v148 = vunpack.c.l.b16 %v125
    %v149 = vunpack.c.h.b16 %v125
    %v150 = vpack.c.b16 %v144, %v142
    %v151 = vpack.c.b16 %v145, %v143
    %v152 = vpack.c.b16 %v148, %v146
    %v153 = vpack.c.b16 %v149, %v147
    %vm158 = vcmask 261120
    %v160 = vsel %vm158, %v121, 0
    %162 = vmatprep.subr.bf16.mxu0 %v151
    %163 = vmatpush1.bf16.msra.mxu0 %v150
    %164 = vmatprep.subr.bf16.mxu0 %v153
    %165 = vmatpush1.bf16.msra.mxu0 %v152
    %166 = vmatprep.subr.bf16.mxu0 0
    %167 = vmatpush1.bf16.msra.mxu0 0
    %168 = vmatprep.subr.bf16.mxu0 0
    %169 = vmatpush1.bf16.msra.mxu0 0
    %170 = vmatprep.subr.bf16.mxu0 0
    %171 = vmatpush1.bf16.msra.mxu0 0
    %172 = vmatprep.subr.bf16.mxu0 0
    %173 = vmatpush1.bf16.msra.mxu0 0
    %174 = vmatprep.subr.bf16.mxu0 0
    %175 = vmatpush1.bf16.msra.mxu0 0
    %176 = vmatprep.subr.bf16.mxu0 0
    %177 = vmatpush1.bf16.msra.mxu0 0
    %178 = vmatprep.subr.bf16.mxu0 0
    %179 = vmatpush1.bf16.msra.mxu0 0
    %180 = vmatprep.subr.bf16.mxu0 0
    %181 = vmatpush1.bf16.msra.mxu0 0
    %182 = vmatprep.subr.bf16.mxu0 0
    %183 = vmatpush1.bf16.msra.mxu0 0
    %184 = vmatprep.subr.bf16.mxu0 0
    %185 = vmatpush1.bf16.msra.mxu0 0
    %186 = vmatprep.subr.bf16.mxu0 0
    %187 = vmatpush1.bf16.msra.mxu0 0
    %188 = vmatprep.subr.bf16.mxu0 0
    %189 = vmatpush1.bf16.msra.mxu0 0
    %190 = vmatprep.subr.bf16.mxu0 0
    %191 = vmatpush1.bf16.msra.mxu0 0
    %192 = vmatprep.subr.bf16.mxu0 0
    %193 = vmatpush1.bf16.msra.mxu0 0
    %194 = vmatprep.mubr.bf16.mxu0 0
    %195 = vmatmul.mubr.bf16.gmra.mrb[0].mxu0 %v160
    %v196 = vpop.f32.mrb[0].mxu0
    %v197 = vadd.f32 %v131, %v196
    %v198 = vpop.f32.mrb[0].mxu0
    %v199 = vadd.f32 %v135, %v198
    %v200 = vpop.f32.mrb[0].mxu0
    %v201 = vpop.f32.mrb[0].mxu0
    %202 = vdwg.mxu0
    %v203 = vmax.f32 %v197, 0.0
    %v204 = vmax.f32 %v199, 0.0
    %v205 = vpack.c.bf16 %v203, %v203
    %v206 = vpack.c.bf16 %v204, %v204
    %v207 = vld [vmem:[#allocation7] sm:$0xff]
    %v208 = vld [vmem:[#allocation7 + $0x8] sm:$0xff]
    %v209 = vld [vmem:[#allocation7 + $0x10] sm:$0xff]
    %v210 = vld [vmem:[#allocation7 + $0x18] sm:$0xff]
    %v211 = vld [vmem:[#allocation7 + $0x20] sm:$0xff]
    %v212 = vld [vmem:[#allocation7 + $0x28] sm:$0xff]
    %v213 = vld [vmem:[#allocation7 + $0x30] sm:$0xff]
    %v214 = vld [vmem:[#allocation7 + $0x38] sm:$0xff]
    %v215 = vld [vmem:[#allocation7 + $0x40] sm:$0xff]
    %v216 = vld [vmem:[#allocation7 + $0x48] sm:$0xff]
    %v217 = vld [vmem:[#allocation7 + $0x50] sm:$0xff]
    %v218 = vld [vmem:[#allocation7 + $0x58] sm:$0xff]
    %v219 = vld [vmem:[#allocation7 + $0x60] sm:$0xff]
    %v220 = vld [vmem:[#allocation7 + $0x68] sm:$0xff]
    %v221 = vld [vmem:[#allocation7 + $0x70] sm:$0xff]
    %v222 = vld [vmem:[#allocation7 + $0x78] sm:$0xff]
    %v223 = vld [vmem:[#allocation7 + $0x80] sm:$0xff]
    %v224 = vld [vmem:[#allocation7 + $0x88] sm:$0xff]
    %v225 = vld [vmem:[#allocation7 + $0x90] sm:$0xff]
    %v226 = vld [vmem:[#allocation7 + $0x98] sm:$0xff]
    %v227 = vld [vmem:[#allocation7 + $0xa0] sm:$0xff]
    %v228 = vld [vmem:[#allocation7 + $0xa8] sm:$0xff]
    %v229 = vld [vmem:[#allocation7 + $0xb0] sm:$0xff]
    %v230 = vld [vmem:[#allocation7 + $0xb8] sm:$0xff]
    %v231 = vld [vmem:[#allocation7 + $0xc0] sm:$0xff]
    %v232 = vld [vmem:[#allocation7 + $0xc8] sm:$0xff]
    %v233 = vld [vmem:[#allocation7 + $0xd0] sm:$0xff]
    %v234 = vld [vmem:[#allocation7 + $0xd8] sm:$0xff]
    %v235 = vld [vmem:[#allocation7 + $0xe0] sm:$0xff]
    %v236 = vld [vmem:[#allocation7 + $0xe8] sm:$0xff]
    %v237 = vld [vmem:[#allocation7 + $0xf0] sm:$0xff]
    %v238 = vld [vmem:[#allocation7 + $0xf8] sm:$0xff]
    %v239 = vld [vmem:[%s4] sm:$0x3]
    %v241 = vlaneseq
    %v242 = vshrl.u32 %v241, 7
    %v243 = vsub.s32 0, %v242
    %v244 = vrot.slane %v239, %v243
    %v245 = vlaneseq
    %v246 = vshrl.u32 %v245, 7
    %v247 = vsub.s32 1, %v246
    %v248 = vrot.slane %v239, %v247
    %v283 = vunpack.c.l.b16 %v207
    %v284 = vunpack.c.h.b16 %v207
    %v285 = vunpack.c.l.b16 %v208
    %v286 = vunpack.c.h.b16 %v208
    %v287 = vunpack.c.l.b16 %v209
    %v288 = vunpack.c.h.b16 %v209
    %v289 = vunpack.c.l.b16 %v210
    %v290 = vunpack.c.h.b16 %v210
    %v291 = vunpack.c.l.b16 %v211
    %v292 = vunpack.c.h.b16 %v211
    %v293 = vunpack.c.l.b16 %v212
    %v294 = vunpack.c.h.b16 %v212
    %v295 = vunpack.c.l.b16 %v213
    %v296 = vunpack.c.h.b16 %v213
    %v297 = vunpack.c.l.b16 %v214
    %v298 = vunpack.c.h.b16 %v214
    %v299 = vunpack.c.l.b16 %v215
    %v300 = vunpack.c.h.b16 %v215
    %v301 = vunpack.c.l.b16 %v216
    %v302 = vunpack.c.h.b16 %v216
    %v303 = vunpack.c.l.b16 %v217
    %v304 = vunpack.c.h.b16 %v217
    %v305 = vunpack.c.l.b16 %v218
    %v306 = vunpack.c.h.b16 %v218
    %v307 = vunpack.c.l.b16 %v219
    %v308 = vunpack.c.h.b16 %v219
    %v309 = vunpack.c.l.b16 %v220
    %v310 = vunpack.c.h.b16 %v220
    %v311 = vunpack.c.l.b16 %v221
    %v312 = vunpack.c.h.b16 %v221
    %v313 = vunpack.c.l.b16 %v222
    %v314 = vunpack.c.h.b16 %v222
    %v315 = vunpack.c.l.b16 %v223
    %v316 = vunpack.c.h.b16 %v223
    %v317 = vunpack.c.l.b16 %v224
    %v318 = vunpack.c.h.b16 %v224
    %v319 = vunpack.c.l.b16 %v225
    %v320 = vunpack.c.h.b16 %v225
    %v321 = vunpack.c.l.b16 %v226
    %v322 = vunpack.c.h.b16 %v226
    %v323 = vunpack.c.l.b16 %v227
    %v324 = vunpack.c.h.b16 %v227
    %v325 = vunpack.c.l.b16 %v228
    %v326 = vunpack.c.h.b16 %v228
    %v327 = vunpack.c.l.b16 %v229
    %v328 = vunpack.c.h.b16 %v229
    %v329 = vunpack.c.l.b16 %v230
    %v330 = vunpack.c.h.b16 %v230
    %v331 = vunpack.c.l.b16 %v231
    %v332 = vunpack.c.h.b16 %v231
    %v333 = vunpack.c.l.b16 %v232
    %v334 = vunpack.c.h.b16 %v232
    %v335 = vunpack.c.l.b16 %v233
    %v336 = vunpack.c.h.b16 %v233
    %v337 = vunpack.c.l.b16 %v234
    %v338 = vunpack.c.h.b16 %v234
    %v339 = vunpack.c.l.b16 %v235
    %v340 = vunpack.c.h.b16 %v235
    %v341 = vunpack.c.l.b16 %v236
    %v342 = vunpack.c.h.b16 %v236
    %v343 = vunpack.c.l.b16 %v237
    %v344 = vunpack.c.h.b16 %v237
    %v345 = vunpack.c.l.b16 %v238
    %v346 = vunpack.c.h.b16 %v238
    %v347 = vpack.c.b16 %v285, %v283
    %v348 = vpack.c.b16 %v286, %v284
    %v349 = vpack.c.b16 %v289, %v287
    %v350 = vpack.c.b16 %v290, %v288
    %v351 = vpack.c.b16 %v293, %v291
    %v352 = vpack.c.b16 %v294, %v292
    %v353 = vpack.c.b16 %v297, %v295
    %v354 = vpack.c.b16 %v298, %v296
    %v355 = vpack.c.b16 %v301, %v299
    %v356 = vpack.c.b16 %v302, %v300
    %v357 = vpack.c.b16 %v305, %v303
    %v358 = vpack.c.b16 %v306, %v304
    %v359 = vpack.c.b16 %v309, %v307
    %v360 = vpack.c.b16 %v310, %v308
    %v361 = vpack.c.b16 %v313, %v311
    %v362 = vpack.c.b16 %v314, %v312
    %v363 = vpack.c.b16 %v317, %v315
    %v364 = vpack.c.b16 %v318, %v316
    %v365 = vpack.c.b16 %v321, %v319
    %v366 = vpack.c.b16 %v322, %v320
    %v367 = vpack.c.b16 %v325, %v323
    %v368 = vpack.c.b16 %v326, %v324
    %v369 = vpack.c.b16 %v329, %v327
    %v370 = vpack.c.b16 %v330, %v328
    %v371 = vpack.c.b16 %v333, %v331
    %v372 = vpack.c.b16 %v334, %v332
    %v373 = vpack.c.b16 %v337, %v335
    %v374 = vpack.c.b16 %v338, %v336
    %v375 = vpack.c.b16 %v341, %v339
    %v376 = vpack.c.b16 %v342, %v340
    %v377 = vpack.c.b16 %v345, %v343
    %v378 = vpack.c.b16 %v346, %v344
    %411 = vmatprep.subr.bf16.mxu0 %v348
    %412 = vmatpush1.bf16.msra.mxu0 %v347
    %413 = vmatprep.subr.bf16.mxu0 %v350
    %414 = vmatpush1.bf16.msra.mxu0 %v349
    %415 = vmatprep.subr.bf16.mxu0 %v352
    %416 = vmatpush1.bf16.msra.mxu0 %v351
    %417 = vmatprep.subr.bf16.mxu0 %v354
    %418 = vmatpush1.bf16.msra.mxu0 %v353
    %419 = vmatprep.subr.bf16.mxu0 %v356
    %420 = vmatpush1.bf16.msra.mxu0 %v355
    %421 = vmatprep.subr.bf16.mxu0 %v358
    %422 = vmatpush1.bf16.msra.mxu0 %v357
    %423 = vmatprep.subr.bf16.mxu0 %v360
    %424 = vmatpush1.bf16.msra.mxu0 %v359
    %425 = vmatprep.subr.bf16.mxu0 %v362
    %426 = vmatpush1.bf16.msra.mxu0 %v361
    %427 = vmatprep.subr.bf16.mxu0 %v364
    %428 = vmatpush1.bf16.msra.mxu0 %v363
    %429 = vmatprep.subr.bf16.mxu0 %v366
    %430 = vmatpush1.bf16.msra.mxu0 %v365
    %431 = vmatprep.subr.bf16.mxu0 %v368
    %432 = vmatpush1.bf16.msra.mxu0 %v367
    %433 = vmatprep.subr.bf16.mxu0 %v370
    %434 = vmatpush1.bf16.msra.mxu0 %v369
    %435 = vmatprep.subr.bf16.mxu0 %v372
    %436 = vmatpush1.bf16.msra.mxu0 %v371
    %437 = vmatprep.subr.bf16.mxu0 %v374
    %438 = vmatpush1.bf16.msra.mxu0 %v373
    %439 = vmatprep.subr.bf16.mxu0 %v376
    %440 = vmatpush1.bf16.msra.mxu0 %v375
    %441 = vmatprep.subr.bf16.mxu0 %v378
    %442 = vmatpush1.bf16.msra.mxu0 %v377
    %443 = vmatprep.mubr.bf16.mxu0 %v206
    %444 = vmatmul.mubr.bf16.gmra.mrb[0].mxu0 %v205
    %v445 = vpop.f32.mrb[0].mxu0
    %v446 = vadd.f32 %v244, %v445
    %v447 = vpop.f32.mrb[0].mxu0
    %v448 = vadd.f32 %v248, %v447
    %v449 = vpop.f32.mrb[0].mxu0
    %v450 = vpop.f32.mrb[0].mxu0
    %451 = vdwg.mxu0
    %v452 = vmax.f32 %v446, 0.0
    %v453 = vmax.f32 %v448, 0.0
    %v454 = vpack.c.bf16 %v452, %v452
    %v455 = vpack.c.bf16 %v453, %v453
    %v456 = vld [vmem:[#allocation8] sm:$0xff]
    %v457 = vld [vmem:[#allocation8 + $0x8] sm:$0xff]
    %v458 = vld [vmem:[#allocation8 + $0x10] sm:$0xff]
    %v459 = vld [vmem:[#allocation8 + $0x18] sm:$0xff]
    %v460 = vld [vmem:[#allocation8 + $0x20] sm:$0xff]
    %v461 = vld [vmem:[#allocation8 + $0x28] sm:$0xff]
    %v462 = vld [vmem:[#allocation8 + $0x30] sm:$0xff]
    %v463 = vld [vmem:[#allocation8 + $0x38] sm:$0xff]
    %v464 = vld [vmem:[#allocation8 + $0x40] sm:$0xff]
    %v465 = vld [vmem:[#allocation8 + $0x48] sm:$0xff]
    %v466 = vld [vmem:[#allocation8 + $0x50] sm:$0xff]
    %v467 = vld [vmem:[#allocation8 + $0x58] sm:$0xff]
    %v468 = vld [vmem:[#allocation8 + $0x60] sm:$0xff]
    %v469 = vld [vmem:[#allocation8 + $0x68] sm:$0xff]
    %v470 = vld [vmem:[#allocation8 + $0x70] sm:$0xff]
    %v471 = vld [vmem:[#allocation8 + $0x78] sm:$0xff]
    %v472 = vld [vmem:[#allocation8 + $0x80] sm:$0xff]
    %v473 = vld [vmem:[#allocation8 + $0x88] sm:$0xff]
    %v474 = vld [vmem:[#allocation8 + $0x90] sm:$0xff]
    %v475 = vld [vmem:[#allocation8 + $0x98] sm:$0xff]
    %v476 = vld [vmem:[#allocation8 + $0xa0] sm:$0xff]
    %v477 = vld [vmem:[#allocation8 + $0xa8] sm:$0xff]
    %v478 = vld [vmem:[#allocation8 + $0xb0] sm:$0xff]
    %v479 = vld [vmem:[#allocation8 + $0xb8] sm:$0xff]
    %v480 = vld [vmem:[#allocation8 + $0xc0] sm:$0xff]
    %v481 = vld [vmem:[#allocation8 + $0xc8] sm:$0xff]
    %v482 = vld [vmem:[#allocation8 + $0xd0] sm:$0xff]
    %v483 = vld [vmem:[#allocation8 + $0xd8] sm:$0xff]
    %v484 = vld [vmem:[#allocation8 + $0xe0] sm:$0xff]
    %v485 = vld [vmem:[#allocation8 + $0xe8] sm:$0xff]
    %v486 = vld [vmem:[#allocation8 + $0xf0] sm:$0xff]
    %v487 = vld [vmem:[#allocation8 + $0xf8] sm:$0xff]
    %v488 = vld [vmem:[%s6] sm:$0x3]
    %v490 = vlaneseq
    %v491 = vshrl.u32 %v490, 7
    %v492 = vsub.s32 0, %v491
    %v493 = vrot.slane %v488, %v492
    %v494 = vlaneseq
    %v495 = vshrl.u32 %v494, 7
    %v496 = vsub.s32 1, %v495
    %v497 = vrot.slane %v488, %v496
    %v532 = vunpack.c.l.b16 %v456
    %v533 = vunpack.c.h.b16 %v456
    %v534 = vunpack.c.l.b16 %v457
    %v535 = vunpack.c.h.b16 %v457
    %v536 = vunpack.c.l.b16 %v458
    %v537 = vunpack.c.h.b16 %v458
    %v538 = vunpack.c.l.b16 %v459
    %v539 = vunpack.c.h.b16 %v459
    %v540 = vunpack.c.l.b16 %v460
    %v541 = vunpack.c.h.b16 %v460
    %v542 = vunpack.c.l.b16 %v461
    %v543 = vunpack.c.h.b16 %v461
    %v544 = vunpack.c.l.b16 %v462
    %v545 = vunpack.c.h.b16 %v462
    %v546 = vunpack.c.l.b16 %v463
    %v547 = vunpack.c.h.b16 %v463
    %v548 = vunpack.c.l.b16 %v464
    %v549 = vunpack.c.h.b16 %v464
    %v550 = vunpack.c.l.b16 %v465
    %v551 = vunpack.c.h.b16 %v465
    %v552 = vunpack.c.l.b16 %v466
    %v553 = vunpack.c.h.b16 %v466
    %v554 = vunpack.c.l.b16 %v467
    %v555 = vunpack.c.h.b16 %v467
    %v556 = vunpack.c.l.b16 %v468
    %v557 = vunpack.c.h.b16 %v468
    %v558 = vunpack.c.l.b16 %v469
    %v559 = vunpack.c.h.b16 %v469
    %v560 = vunpack.c.l.b16 %v470
    %v561 = vunpack.c.h.b16 %v470
    %v562 = vunpack.c.l.b16 %v471
    %v563 = vunpack.c.h.b16 %v471
    %v564 = vunpack.c.l.b16 %v472
    %v565 = vunpack.c.h.b16 %v472
    %v566 = vunpack.c.l.b16 %v473
    %v567 = vunpack.c.h.b16 %v473
    %v568 = vunpack.c.l.b16 %v474
    %v569 = vunpack.c.h.b16 %v474
    %v570 = vunpack.c.l.b16 %v475
    %v571 = vunpack.c.h.b16 %v475
    %v572 = vunpack.c.l.b16 %v476
    %v573 = vunpack.c.h.b16 %v476
    %v574 = vunpack.c.l.b16 %v477
    %v575 = vunpack.c.h.b16 %v477
    %v576 = vunpack.c.l.b16 %v478
    %v577 = vunpack.c.h.b16 %v478
    %v578 = vunpack.c.l.b16 %v479
    %v579 = vunpack.c.h.b16 %v479
    %v580 = vunpack.c.l.b16 %v480
    %v581 = vunpack.c.h.b16 %v480
    %v582 = vunpack.c.l.b16 %v481
    %v583 = vunpack.c.h.b16 %v481
    %v584 = vunpack.c.l.b16 %v482
    %v585 = vunpack.c.h.b16 %v482
    %v586 = vunpack.c.l.b16 %v483
    %v587 = vunpack.c.h.b16 %v483
    %v588 = vunpack.c.l.b16 %v484
    %v589 = vunpack.c.h.b16 %v484
    %v590 = vunpack.c.l.b16 %v485
    %v591 = vunpack.c.h.b16 %v485
    %v592 = vunpack.c.l.b16 %v486
    %v593 = vunpack.c.h.b16 %v486
    %v594 = vunpack.c.l.b16 %v487
    %v595 = vunpack.c.h.b16 %v487
    %v596 = vpack.c.b16 %v534, %v532
    %v597 = vpack.c.b16 %v535, %v533
    %v598 = vpack.c.b16 %v538, %v536
    %v599 = vpack.c.b16 %v539, %v537
    %v600 = vpack.c.b16 %v542, %v540
    %v601 = vpack.c.b16 %v543, %v541
    %v602 = vpack.c.b16 %v546, %v544
    %v603 = vpack.c.b16 %v547, %v545
    %v604 = vpack.c.b16 %v550, %v548
    %v605 = vpack.c.b16 %v551, %v549
    %v606 = vpack.c.b16 %v554, %v552
    %v607 = vpack.c.b16 %v555, %v553
    %v608 = vpack.c.b16 %v558, %v556
    %v609 = vpack.c.b16 %v559, %v557
    %v610 = vpack.c.b16 %v562, %v560
    %v611 = vpack.c.b16 %v563, %v561
    %v612 = vpack.c.b16 %v566, %v564
    %v613 = vpack.c.b16 %v567, %v565
    %v614 = vpack.c.b16 %v570, %v568
    %v615 = vpack.c.b16 %v571, %v569
    %v616 = vpack.c.b16 %v574, %v572
    %v617 = vpack.c.b16 %v575, %v573
    %v618 = vpack.c.b16 %v578, %v576
    %v619 = vpack.c.b16 %v579, %v577
    %v620 = vpack.c.b16 %v582, %v580
    %v621 = vpack.c.b16 %v583, %v581
    %v622 = vpack.c.b16 %v586, %v584
    %v623 = vpack.c.b16 %v587, %v585
    %v624 = vpack.c.b16 %v590, %v588
    %v625 = vpack.c.b16 %v591, %v589
    %v626 = vpack.c.b16 %v594, %v592
    %v627 = vpack.c.b16 %v595, %v593
    %660 = vmatprep.subr.bf16.mxu0 %v597
    %661 = vmatpush1.bf16.msra.mxu0 %v596
    %662 = vmatprep.subr.bf16.mxu0 %v599
    %663 = vmatpush1.bf16.msra.mxu0 %v598
    %664 = vmatprep.subr.bf16.mxu0 %v601
    %665 = vmatpush1.bf16.msra.mxu0 %v600
    %666 = vmatprep.subr.bf16.mxu0 %v603
    %667 = vmatpush1.bf16.msra.mxu0 %v602
    %668 = vmatprep.subr.bf16.mxu0 %v605
    %669 = vmatpush1.bf16.msra.mxu0 %v604
    %670 = vmatprep.subr.bf16.mxu0 %v607
    %671 = vmatpush1.bf16.msra.mxu0 %v606
    %672 = vmatprep.subr.bf16.mxu0 %v609
    %673 = vmatpush1.bf16.msra.mxu0 %v608
    %674 = vmatprep.subr.bf16.mxu0 %v611
    %675 = vmatpush1.bf16.msra.mxu0 %v610
    %676 = vmatprep.subr.bf16.mxu0 %v613
    %677 = vmatpush1.bf16.msra.mxu0 %v612
    %678 = vmatprep.subr.bf16.mxu0 %v615
    %679 = vmatpush1.bf16.msra.mxu0 %v614
    %680 = vmatprep.subr.bf16.mxu0 %v617
    %681 = vmatpush1.bf16.msra.mxu0 %v616
    %682 = vmatprep.subr.bf16.mxu0 %v619
    %683 = vmatpush1.bf16.msra.mxu0 %v618
    %684 = vmatprep.subr.bf16.mxu0 %v621
    %685 = vmatpush1.bf16.msra.mxu0 %v620
    %686 = vmatprep.subr.bf16.mxu0 %v623
    %687 = vmatpush1.bf16.msra.mxu0 %v622
    %688 = vmatprep.subr.bf16.mxu0 %v625
    %689 = vmatpush1.bf16.msra.mxu0 %v624
    %690 = vmatprep.subr.bf16.mxu0 %v627
    %691 = vmatpush1.bf16.msra.mxu0 %v626
    %692 = vmatprep.mubr.bf16.mxu0 %v455
    %693 = vmatmul.mubr.bf16.gmra.mrb[0].mxu0 %v454
    %v694 = vpop.f32.mrb[0].mxu0
    %v695 = vadd.f32 %v493, %v694
    %v696 = vpop.f32.mrb[0].mxu0
    %v697 = vadd.f32 %v497, %v696
    %v698 = vpop.f32.mrb[0].mxu0
    %v699 = vpop.f32.mrb[0].mxu0
    %700 = vdwg.mxu0
    %v701 = vmax.f32 %v695, 0.0
    %v702 = vmax.f32 %v697, 0.0
    %v703 = vpack.c.bf16 %v701, %v701
    %v704 = vpack.c.bf16 %v702, %v702
    %v705 = vld [vmem:[#allocation10] sm:$0xff]
    %v706 = vld [vmem:[#allocation10 + $0x8] sm:$0xff]
    %v707 = vld [vmem:[#allocation10 + $0x10] sm:$0xff]
    %v708 = vld [vmem:[#allocation10 + $0x18] sm:$0xff]
    %v709 = vld [vmem:[#allocation10 + $0x20] sm:$0xff]
    %v710 = vld [vmem:[#allocation10 + $0x28] sm:$0xff]
    %v711 = vld [vmem:[#allocation10 + $0x30] sm:$0xff]
    %v712 = vld [vmem:[#allocation10 + $0x38] sm:$0xff]
    %v713 = vld [vmem:[#allocation10 + $0x40] sm:$0xff]
    %v714 = vld [vmem:[#allocation10 + $0x48] sm:$0xff]
    %v715 = vld [vmem:[#allocation10 + $0x50] sm:$0xff]
    %v716 = vld [vmem:[#allocation10 + $0x58] sm:$0xff]
    %v717 = vld [vmem:[#allocation10 + $0x60] sm:$0xff]
    %v718 = vld [vmem:[#allocation10 + $0x68] sm:$0xff]
    %v719 = vld [vmem:[#allocation10 + $0x70] sm:$0xff]
    %v720 = vld [vmem:[#allocation10 + $0x78] sm:$0xff]
    %v721 = vld [vmem:[#allocation10 + $0x80] sm:$0xff]
    %v722 = vld [vmem:[#allocation10 + $0x88] sm:$0xff]
    %v723 = vld [vmem:[#allocation10 + $0x90] sm:$0xff]
    %v724 = vld [vmem:[#allocation10 + $0x98] sm:$0xff]
    %v725 = vld [vmem:[#allocation10 + $0xa0] sm:$0xff]
    %v726 = vld [vmem:[#allocation10 + $0xa8] sm:$0xff]
    %v727 = vld [vmem:[#allocation10 + $0xb0] sm:$0xff]
    %v728 = vld [vmem:[#allocation10 + $0xb8] sm:$0xff]
    %v729 = vld [vmem:[#allocation10 + $0xc0] sm:$0xff]
    %v730 = vld [vmem:[#allocation10 + $0xc8] sm:$0xff]
    %v731 = vld [vmem:[#allocation10 + $0xd0] sm:$0xff]
    %v732 = vld [vmem:[#allocation10 + $0xd8] sm:$0xff]
    %v733 = vld [vmem:[#allocation10 + $0xe0] sm:$0xff]
    %v734 = vld [vmem:[#allocation10 + $0xe8] sm:$0xff]
    %v735 = vld [vmem:[#allocation10 + $0xf0] sm:$0xff]
    %v736 = vld [vmem:[#allocation10 + $0xf8] sm:$0xff]
    %v737 = vld [vmem:[%s8] sm:$0x3]
    %v739 = vlaneseq
    %v740 = vshrl.u32 %v739, 7
    %v741 = vsub.s32 0, %v740
    %v742 = vrot.slane %v737, %v741
    %v743 = vlaneseq
    %v744 = vshrl.u32 %v743, 7
    %v745 = vsub.s32 1, %v744
    %v746 = vrot.slane %v737, %v745
    %v781 = vunpack.c.l.b16 %v705
    %v782 = vunpack.c.h.b16 %v705
    %v783 = vunpack.c.l.b16 %v706
    %v784 = vunpack.c.h.b16 %v706
    %v785 = vunpack.c.l.b16 %v707
    %v786 = vunpack.c.h.b16 %v707
    %v787 = vunpack.c.l.b16 %v708
    %v788 = vunpack.c.h.b16 %v708
    %v789 = vunpack.c.l.b16 %v709
    %v790 = vunpack.c.h.b16 %v709
    %v791 = vunpack.c.l.b16 %v710
    %v792 = vunpack.c.h.b16 %v710
    %v793 = vunpack.c.l.b16 %v711
    %v794 = vunpack.c.h.b16 %v711
    %v795 = vunpack.c.l.b16 %v712
    %v796 = vunpack.c.h.b16 %v712
    %v797 = vunpack.c.l.b16 %v713
    %v798 = vunpack.c.h.b16 %v713
    %v799 = vunpack.c.l.b16 %v714
    %v800 = vunpack.c.h.b16 %v714
    %v801 = vunpack.c.l.b16 %v715
    %v802 = vunpack.c.h.b16 %v715
    %v803 = vunpack.c.l.b16 %v716
    %v804 = vunpack.c.h.b16 %v716
    %v805 = vunpack.c.l.b16 %v717
    %v806 = vunpack.c.h.b16 %v717
    %v807 = vunpack.c.l.b16 %v718
    %v808 = vunpack.c.h.b16 %v718
    %v809 = vunpack.c.l.b16 %v719
    %v810 = vunpack.c.h.b16 %v719
    %v811 = vunpack.c.l.b16 %v720
    %v812 = vunpack.c.h.b16 %v720
    %v813 = vunpack.c.l.b16 %v721
    %v814 = vunpack.c.h.b16 %v721
    %v815 = vunpack.c.l.b16 %v722
    %v816 = vunpack.c.h.b16 %v722
    %v817 = vunpack.c.l.b16 %v723
    %v818 = vunpack.c.h.b16 %v723
    %v819 = vunpack.c.l.b16 %v724
    %v820 = vunpack.c.h.b16 %v724
    %v821 = vunpack.c.l.b16 %v725
    %v822 = vunpack.c.h.b16 %v725
    %v823 = vunpack.c.l.b16 %v726
    %v824 = vunpack.c.h.b16 %v726
    %v825 = vunpack.c.l.b16 %v727
    %v826 = vunpack.c.h.b16 %v727
    %v827 = vunpack.c.l.b16 %v728
    %v828 = vunpack.c.h.b16 %v728
    %v829 = vunpack.c.l.b16 %v729
    %v830 = vunpack.c.h.b16 %v729
    %v831 = vunpack.c.l.b16 %v730
    %v832 = vunpack.c.h.b16 %v730
    %v833 = vunpack.c.l.b16 %v731
    %v834 = vunpack.c.h.b16 %v731
    %v835 = vunpack.c.l.b16 %v732
    %v836 = vunpack.c.h.b16 %v732
    %v837 = vunpack.c.l.b16 %v733
    %v838 = vunpack.c.h.b16 %v733
    %v839 = vunpack.c.l.b16 %v734
    %v840 = vunpack.c.h.b16 %v734
    %v841 = vunpack.c.l.b16 %v735
    %v842 = vunpack.c.h.b16 %v735
    %v843 = vunpack.c.l.b16 %v736
    %v844 = vunpack.c.h.b16 %v736
    %v845 = vpack.c.b16 %v783, %v781
    %v846 = vpack.c.b16 %v784, %v782
    %v847 = vpack.c.b16 %v787, %v785
    %v848 = vpack.c.b16 %v788, %v786
    %v849 = vpack.c.b16 %v791, %v789
    %v850 = vpack.c.b16 %v792, %v790
    %v851 = vpack.c.b16 %v795, %v793
    %v852 = vpack.c.b16 %v796, %v794
    %v853 = vpack.c.b16 %v799, %v797
    %v854 = vpack.c.b16 %v800, %v798
    %v855 = vpack.c.b16 %v803, %v801
    %v856 = vpack.c.b16 %v804, %v802
    %v857 = vpack.c.b16 %v807, %v805
    %v858 = vpack.c.b16 %v808, %v806
    %v859 = vpack.c.b16 %v811, %v809
    %v860 = vpack.c.b16 %v812, %v810
    %v861 = vpack.c.b16 %v815, %v813
    %v862 = vpack.c.b16 %v816, %v814
    %v863 = vpack.c.b16 %v819, %v817
    %v864 = vpack.c.b16 %v820, %v818
    %v865 = vpack.c.b16 %v823, %v821
    %v866 = vpack.c.b16 %v824, %v822
    %v867 = vpack.c.b16 %v827, %v825
    %v868 = vpack.c.b16 %v828, %v826
    %v869 = vpack.c.b16 %v831, %v829
    %v870 = vpack.c.b16 %v832, %v830
    %v871 = vpack.c.b16 %v835, %v833
    %v872 = vpack.c.b16 %v836, %v834
    %v873 = vpack.c.b16 %v839, %v837
    %v874 = vpack.c.b16 %v840, %v838
    %v875 = vpack.c.b16 %v843, %v841
    %v876 = vpack.c.b16 %v844, %v842
    %909 = vmatprep.subr.bf16.mxu0 %v846
    %910 = vmatpush1.bf16.msra.mxu0 %v845
    %911 = vmatprep.subr.bf16.mxu0 %v848
    %912 = vmatpush1.bf16.msra.mxu0 %v847
    %913 = vmatprep.subr.bf16.mxu0 %v850
    %914 = vmatpush1.bf16.msra.mxu0 %v849
    %915 = vmatprep.subr.bf16.mxu0 %v852
    %916 = vmatpush1.bf16.msra.mxu0 %v851
    %917 = vmatprep.subr.bf16.mxu0 %v854
    %918 = vmatpush1.bf16.msra.mxu0 %v853
    %919 = vmatprep.subr.bf16.mxu0 %v856
    %920 = vmatpush1.bf16.msra.mxu0 %v855
    %921 = vmatprep.subr.bf16.mxu0 %v858
    %922 = vmatpush1.bf16.msra.mxu0 %v857
    %923 = vmatprep.subr.bf16.mxu0 %v860
    %924 = vmatpush1.bf16.msra.mxu0 %v859
    %925 = vmatprep.subr.bf16.mxu0 %v862
    %926 = vmatpush1.bf16.msra.mxu0 %v861
    %927 = vmatprep.subr.bf16.mxu0 %v864
    %928 = vmatpush1.bf16.msra.mxu0 %v863
    %929 = vmatprep.subr.bf16.mxu0 %v866
    %930 = vmatpush1.bf16.msra.mxu0 %v865
    %931 = vmatprep.subr.bf16.mxu0 %v868
    %932 = vmatpush1.bf16.msra.mxu0 %v867
    %933 = vmatprep.subr.bf16.mxu0 %v870
    %934 = vmatpush1.bf16.msra.mxu0 %v869
    %935 = vmatprep.subr.bf16.mxu0 %v872
    %936 = vmatpush1.bf16.msra.mxu0 %v871
    %937 = vmatprep.subr.bf16.mxu0 %v874
    %938 = vmatpush1.bf16.msra.mxu0 %v873
    %939 = vmatprep.subr.bf16.mxu0 %v876
    %940 = vmatpush1.bf16.msra.mxu0 %v875
    %941 = vmatprep.mubr.bf16.mxu0 %v704
    %942 = vmatmul.mubr.bf16.gmra.mrb[0].mxu0 %v703
    %v943 = vpop.f32.mrb[0].mxu0
    %v944 = vadd.f32 %v742, %v943
    %v945 = vpop.f32.mrb[0].mxu0
    %v946 = vadd.f32 %v746, %v945
    %v947 = vpop.f32.mrb[0].mxu0
    %v948 = vpop.f32.mrb[0].mxu0
    %949 = vdwg.mxu0
    %v950 = vmax.f32 %v944, 0.0
    %v951 = vmax.f32 %v946, 0.0
    %v952 = vpack.c.bf16 %v950, %v950
    %v953 = vpack.c.bf16 %v951, %v951
    %v954 = vld [vmem:[#allocation11] sm:$0xf]
    %v955 = vld [vmem:[#allocation11 + $0x4] sm:$0xf]
    %v956 = vld [vmem:[#allocation11 + $0x8] sm:$0xf]
    %v957 = vld [vmem:[#allocation11 + $0xc] sm:$0xf]
    %v958 = vld [vmem:[#allocation11 + $0x10] sm:$0xf]
    %v959 = vld [vmem:[#allocation11 + $0x14] sm:$0xf]
    %v960 = vld [vmem:[#allocation11 + $0x18] sm:$0xf]
    %v961 = vld [vmem:[#allocation11 + $0x1c] sm:$0xf]
    %v962 = vld [vmem:[#allocation11 + $0x20] sm:$0xf]
    %v963 = vld [vmem:[#allocation11 + $0x24] sm:$0xf]
    %v964 = vld [vmem:[#allocation11 + $0x28] sm:$0xf]
    %v965 = vld [vmem:[#allocation11 + $0x2c] sm:$0xf]
    %v966 = vld [vmem:[#allocation11 + $0x30] sm:$0xf]
    %v967 = vld [vmem:[#allocation11 + $0x34] sm:$0xf]
    %v968 = vld [vmem:[#allocation11 + $0x38] sm:$0xf]
    %v969 = vld [vmem:[#allocation11 + $0x3c] sm:$0xf]
    %v970 = vld [vmem:[#allocation11 + $0x40] sm:$0xf]
    %v971 = vld [vmem:[#allocation11 + $0x44] sm:$0xf]
    %v972 = vld [vmem:[#allocation11 + $0x48] sm:$0xf]
    %v973 = vld [vmem:[#allocation11 + $0x4c] sm:$0xf]
    %v974 = vld [vmem:[#allocation11 + $0x50] sm:$0xf]
    %v975 = vld [vmem:[#allocation11 + $0x54] sm:$0xf]
    %v976 = vld [vmem:[#allocation11 + $0x58] sm:$0xf]
    %v977 = vld [vmem:[#allocation11 + $0x5c] sm:$0xf]
    %v978 = vld [vmem:[#allocation11 + $0x60] sm:$0xf]
    %v979 = vld [vmem:[#allocation11 + $0x64] sm:$0xf]
    %v980 = vld [vmem:[#allocation11 + $0x68] sm:$0xf]
    %v981 = vld [vmem:[#allocation11 + $0x6c] sm:$0xf]
    %v982 = vld [vmem:[#allocation11 + $0x70] sm:$0xf]
    %v983 = vld [vmem:[#allocation11 + $0x74] sm:$0xf]
    %v984 = vld [vmem:[#allocation11 + $0x78] sm:$0xf]
    %v985 = vld [vmem:[#allocation11 + $0x7c] sm:$0xf]
    %v986 = vld [vmem:[%s10] sm:$0x1]
    %v988 = vlaneseq
    %v989 = vshrl.u32 %v988, 7
    %v990 = vsub.s32 0, %v989
    %v991 = vrot.slane %v986, %v990
    %v1025 = vunpack.c.l.b16 %v954
    %v1026 = vunpack.c.l.b16 %v955
    %v1027 = vunpack.c.l.b16 %v956
    %v1028 = vunpack.c.l.b16 %v957
    %v1029 = vunpack.c.l.b16 %v958
    %v1030 = vunpack.c.l.b16 %v959
    %v1031 = vunpack.c.l.b16 %v960
    %v1032 = vunpack.c.l.b16 %v961
    %v1033 = vunpack.c.l.b16 %v962
    %v1034 = vunpack.c.l.b16 %v963
    %v1035 = vunpack.c.l.b16 %v964
    %v1036 = vunpack.c.l.b16 %v965
    %v1037 = vunpack.c.l.b16 %v966
    %v1038 = vunpack.c.l.b16 %v967
    %v1039 = vunpack.c.l.b16 %v968
    %v1040 = vunpack.c.l.b16 %v969
    %v1041 = vunpack.c.l.b16 %v970
    %v1042 = vunpack.c.l.b16 %v971
    %v1043 = vunpack.c.l.b16 %v972
    %v1044 = vunpack.c.l.b16 %v973
    %v1045 = vunpack.c.l.b16 %v974
    %v1046 = vunpack.c.l.b16 %v975
    %v1047 = vunpack.c.l.b16 %v976
    %v1048 = vunpack.c.l.b16 %v977
    %v1049 = vunpack.c.l.b16 %v978
    %v1050 = vunpack.c.l.b16 %v979
    %v1051 = vunpack.c.l.b16 %v980
    %v1052 = vunpack.c.l.b16 %v981
    %v1053 = vunpack.c.l.b16 %v982
    %v1054 = vunpack.c.l.b16 %v983
    %v1055 = vunpack.c.l.b16 %v984
    %v1056 = vunpack.c.l.b16 %v985
    %v1057 = vpack.c.b16 %v1026, %v1025
    %v1058 = vpack.c.b16 %v1028, %v1027
    %v1059 = vpack.c.b16 %v1030, %v1029
    %v1060 = vpack.c.b16 %v1032, %v1031
    %v1061 = vpack.c.b16 %v1034, %v1033
    %v1062 = vpack.c.b16 %v1036, %v1035
    %v1063 = vpack.c.b16 %v1038, %v1037
    %v1064 = vpack.c.b16 %v1040, %v1039
    %v1065 = vpack.c.b16 %v1042, %v1041
    %v1066 = vpack.c.b16 %v1044, %v1043
    %v1067 = vpack.c.b16 %v1046, %v1045
    %v1068 = vpack.c.b16 %v1048, %v1047
    %v1069 = vpack.c.b16 %v1050, %v1049
    %v1070 = vpack.c.b16 %v1052, %v1051
    %v1071 = vpack.c.b16 %v1054, %v1053
    %v1072 = vpack.c.b16 %v1056, %v1055
    %1089 = vmatprep.subr.bf16.mxu0 0
    %1090 = vmatpush1.bf16.msra.mxu0 %v1057
    %1091 = vmatprep.subr.bf16.mxu0 0
    %1092 = vmatpush1.bf16.msra.mxu0 %v1058
    %1093 = vmatprep.subr.bf16.mxu0 0
    %1094 = vmatpush1.bf16.msra.mxu0 %v1059
    %1095 = vmatprep.subr.bf16.mxu0 0
    %1096 = vmatpush1.bf16.msra.mxu0 %v1060
    %1097 = vmatprep.subr.bf16.mxu0 0
    %1098 = vmatpush1.bf16.msra.mxu0 %v1061
    %1099 = vmatprep.subr.bf16.mxu0 0
    %1100 = vmatpush1.bf16.msra.mxu0 %v1062
    %1101 = vmatprep.subr.bf16.mxu0 0
    %1102 = vmatpush1.bf16.msra.mxu0 %v1063
    %1103 = vmatprep.subr.bf16.mxu0 0
    %1104 = vmatpush1.bf16.msra.mxu0 %v1064
    %1105 = vmatprep.subr.bf16.mxu0 0
    %1106 = vmatpush1.bf16.msra.mxu0 %v1065
    %1107 = vmatprep.subr.bf16.mxu0 0
    %1108 = vmatpush1.bf16.msra.mxu0 %v1066
    %1109 = vmatprep.subr.bf16.mxu0 0
    %1110 = vmatpush1.bf16.msra.mxu0 %v1067
    %1111 = vmatprep.subr.bf16.mxu0 0
    %1112 = vmatpush1.bf16.msra.mxu0 %v1068
    %1113 = vmatprep.subr.bf16.mxu0 0
    %1114 = vmatpush1.bf16.msra.mxu0 %v1069
    %1115 = vmatprep.subr.bf16.mxu0 0
    %1116 = vmatpush1.bf16.msra.mxu0 %v1070
    %1117 = vmatprep.subr.bf16.mxu0 0
    %1118 = vmatpush1.bf16.msra.mxu0 %v1071
    %1119 = vmatprep.subr.bf16.mxu0 0
    %1120 = vmatpush1.bf16.msra.mxu0 %v1072
    %1121 = vmatprep.mubr.bf16.mxu0 %v953
    %1122 = vmatmul.mubr.bf16.gmra.mrb[0].mxu0 %v952
    %v1123 = vpop.f32.mrb[0].mxu0
    %v1124 = vadd.f32 %v991, %v1123
    %v1125 = vpop.f32.mrb[0].mxu0
    %v1126 = vpop.f32.mrb[0].mxu0
    %v1127 = vpop.f32.mrb[0].mxu0
    %1128 = vdwg.mxu0
    %v1129 = vmax.f32 %v1124, -9.21
    %v1130 = vmin.f32 %v1129, 1.38
    %v1131 = vmul.f32 %v1130, 1.442695
    %v1132 = vpow.pop %v1131
    %1134 = vrot.lane.b32.xlu0 %v120, 100
    %v1135 = vpop.permute.xlu0 %1134
    %v1137 = vmul.f32 %v1132, %v1135
    %1139 = vrot.lane.b32.xlu0 %v1137, 124
    %v1140 = vpop.permute.xlu0 %1139
    %v1142 = vadd.f32 %v1124, %v1140
    %v1143 = vtanh.pop %v1142
    %v1144 = vadd.f32 %v1143, 0.0
    %v1145 = vmul.f32 %v120, -0.5
    %v1146 = vmul.f32 %v1145, %v120
    %1148 = vrot.lane.b32.xlu0 %v1130, 28
    %v1149 = vpop.permute.xlu0 %1148
    %v1151 = vsub.f32 %v1146, %v1149
    %v1152 = vsub.f32 %v1151, 0.9189385
    %v1153 = vmul.f32 %v1143, %v1143
    %v1154 = vsub.f32 1.0, %v1153
    %v1155 = vadd.f32 %v1154, 1e-06
    %v1156 = vlog2.pop %v1155
    %v1157 = vmul.f32 %v1156, 0.6931472
    %1159 = vrot.lane.b32.xlu0 %v1157, 32
    %v1160 = vpop.permute.xlu0 %1159
    %v1162 = vsub.f32 %v1152, %v1160
    %1164 = vrot.lane.b32.xlu0 %v1162, 96
    %v1165 = vpop.permute.xlu0 %1164
    %vm1167 = vcmask 31744
    %v1168 = vsel %vm1167, %v1165, 0.0
    %1169 = vadd.xlane.f32.xlu0 %v1168
    %v1170 = vpop.xlane.xlu0 %1169
    %v1171 = vtanh.pop %v1124
    %v1172 = vadd.f32 %v1171, 0.0
    %1173 = vst.msk [vmem:[#allocation13] sm:$0xff] %vm1167, %v1144
    %vm1174 = vcmask 72768
    %1175 = vst.msk [vmem:[#allocation13] sm:$0xff] %vm1174, %v1170
    %1177 = vrot.lane.b32.xlu0 %v1172, 16
    %v1178 = vpop.permute.xlu0 %1177
    %vm1180 = vcmask 162944
    %1181 = vst.msk [vmem:[#allocation13] sm:$0xff] %vm1180, %v1178
    %1182 = vrot.lane.b32.xlu0 %v1130, 16
    %v1183 = vpop.permute.xlu0 %1182
    %vm1185 = vcmask 195744
    %1186 = vst.msk [vmem:[#allocation13] sm:$0xff] %vm1185, %v1183
    // Predicated region
    $region70: #{tpu_custom_call.1} parent=1 // pred_check
      _
    $region71: #{tpu_custom_call.1} parent=1 // pred_check_branch
      %1188 = sbr.rel (0) target = $region73
    $region72: #{tpu_custom_call.1} parent=1 // pred_region
      %s1190 = ssub.s32 128, 128
      %1191 = vsyncadd [#allocation4], %s1190
      %s1193 = sshll.u32 [#allocation13], 4
      %s1194 = int_to_ptr.vmem [resolvable:$true] %s1193
      %1196 = dma.vmem_to_hbm [thread:$0]  %s1194, 128, %s11, [#allocation4]
    $region73: #{tpu_custom_call.1} parent=1 // pred_fallthru
      _
    // Predicated region
    $region74: #{tpu_custom_call.1} parent=1 // pred_check
      _
    $region75: #{tpu_custom_call.1} parent=1 // pred_check_branch
      %1198 = sbr.rel (0) target = $region77
    $region76: #{tpu_custom_call.1} parent=1 // pred_region
      %1199 = dma.done [#allocation4], 128
    $region77: #{tpu_custom_call.1} parent=1 // pred_fallthru
      _
    %1200 = vsyncpa [#allocation3], 1
    %1201 = vsyncpa [#allocation6], 1
    %1202 = vsyncpa [#allocation9], 1
    %1203 = vsyncpa [#allocation12], 1
    %1204 = vsyncpa [#allocation4], 1

</llo_original>
